<compile_context>
chip_gen: v6e
topology: v6e:2x2x1
jax: 0.10.0
libtpu: 0.0.40
codegen_flags: <defaults>
</compile_context>

<pallas_src>
import jax
import jax.numpy as jnp
from jax.experimental import pallas as pl
from jax.experimental.pallas import tpu as pltpu


def _round_up(x, m):
    return ((x + m - 1) // m) * m


def conv2d_pallas(x, weight, bias, *, stride=1, padding=0):
    """Valid convolution. x: (N, C, H, W) f32; weight: (OC, IC, KH, KW); bias: (OC,)."""
    N, C, H, W = x.shape
    OC, IC, KH, KW = weight.shape
    assert C == IC
    # Load-bearing: the flat-shift im2col trick below assumes stride 1, no padding
    # (matches nn.Conv2d(3, 6, 3, 1, 0)).
    assert stride == 1 and padding == 0
    OH = H - KH + 1
    OW = W - KW + 1

    # Per-batch flattened-spatial GEMM:
    #   out[oc, n*HW + oh*W + ow] =
    #       sum_{kh,kw,c} w[oc,c,kh,kw] * x_flat[n, c, oh*W+ow + kh*W+kw]
    # All H*W columns per image are computed (lane-dense, multiple of 128); the
    # invalid ow>=OW / oh>=OH columns are cropped in the wrapper.
    HW = H * W                                   # output columns per image
    max_shift = (KH - 1) * W + (KW - 1)          # largest tap offset
    P = _round_up(HW + max_shift, 128)           # zero-padded flat input length
    NHW = N * HW                                 # wide lane axis of the output

    x_flat = jnp.pad(x.reshape(N, C, HW), ((0, 0), (0, 0), (0, P - HW)))
    # Single (OC, KH*KW*C) weight tile; row order (kh, kw, c) matches the
    # in-kernel tap-matrix row order.
    w2 = weight.transpose(0, 2, 3, 1).reshape(OC, KH * KW * C)
    b2 = bias.reshape(OC, 1)

    shifts = tuple(kh * W + kw for kh in range(KH) for kw in range(KW))

    def kernel(x_ref, w_ref, b_ref, o_ref):
        # x_ref: (N, C, P)   w_ref: (OC, KH*KW*C)   b_ref: (OC, 1)   o_ref: (OC, N*HW)
        # Build the im2col tap matrix (KH*KW*C, N*HW) once, in registers.
        taps = []
        for s in shifts:                                          # static unroll
            cols = [x_ref[n, :, pl.ds(s, HW)] for n in range(N)]  # (C, HW) each
            taps.append(cols[0] if N == 1 else jnp.concatenate(cols, axis=-1))
        t = jnp.concatenate(taps, axis=0)                         # (KH*KW*C, N*HW)
        # Single MXU contraction (replaces KH*KW small accumulated matmuls).
        acc = jnp.dot(w_ref[...], t,
                      preferred_element_type=jnp.float32,
                      precision=jax.lax.Precision.HIGHEST)        # (OC, N*HW)
        o_ref[...] = (acc + b_ref[...]).astype(o_ref.dtype)

    cost = pl.CostEstimate(
        flops=2 * N * OC * C * KH * KW * OH * OW,
        transcendentals=0,
        bytes_accessed=4 * (x_flat.size + w2.size + b2.size + OC * NHW),
    )

    out = pl.pallas_call(
        kernel,
        out_shape=jax.ShapeDtypeStruct((OC, NHW), x.dtype),
        grid=(1,),                                      # whole batch in one step
        in_specs=[
            pl.BlockSpec((N, C, P), lambda i: (0, 0, 0)),
            pl.BlockSpec((OC, KH * KW * C), lambda i: (0, 0)),
            pl.BlockSpec((OC, 1), lambda i: (0, 0)),
        ],
        out_specs=pl.BlockSpec((OC, NHW), lambda i: (0, 0)),
        compiler_params=pltpu.CompilerParams(
            dimension_semantics=("arbitrary",)),
        cost_estimate=cost,
    )(x_flat, w2, b2)

    # Columns are (n, oh*W + ow); crop invalid oh/ow and return NCHW.
    return out.reshape(OC, N, H, W).transpose(1, 0, 2, 3)[:, :, :OH, :OW]


class ConvPallas:
    """Mirror of the PyTorch `Conv` module: conv1 = nn.Conv2d(3, 6, 3, 1, 0)."""

    def __init__(self, key):
        IC, OC, KH, KW = 3, 6, 3, 3
        k_w, k_b = jax.random.split(key)
        fan_in = IC * KH * KW
        bound = 1.0 / jnp.sqrt(fan_in)  # PyTorch default uniform bound
        self.weight = jax.random.uniform(
            k_w, (OC, IC, KH, KW), jnp.float32, minval=-bound, maxval=bound)
        self.bias = jax.random.uniform(
            k_b, (OC,), jnp.float32, minval=-bound, maxval=bound)

    def __call__(self, x):
        return conv2d_pallas(x, self.weight, self.bias)


if __name__ == "__main__":
    key = jax.random.PRNGKey(0)
    k_param, k_x = jax.random.split(key)

    model = ConvPallas(k_param)
    x = jax.random.normal(k_x, (2, 3, 16, 16), dtype=jnp.float32)  # NCHW

    y = jax.block_until_ready(model(x))
    assert y.shape == (2, 6, 14, 14), y.shape

    # Cross-check against XLA's native conv for correctness.
    y_ref = jax.lax.conv_general_dilated(
        x, model.weight, window_strides=(1, 1), padding="VALID",
        dimension_numbers=("NCHW", "OIHW", "NCHW"),
        precision=jax.lax.Precision.HIGHEST) + model.bias[None, :, None, None]
    assert jnp.allclose(y, y_ref, atol=1e-5, rtol=1e-5), float(jnp.abs(y - y_ref).max())

    print("KERNEL_OK")
</pallas_src>

<mosaic_0001>
module attributes {stable_mosaic.version = 11 : i64} {
  func.func @kernel(%arg0: i32, %arg1: memref<2x3x384xf32, #tpu.memory_space<vmem>>, %arg2: memref<6x27xf32, #tpu.memory_space<vmem>>, %arg3: memref<6x1xf32, #tpu.memory_space<vmem>>, %arg4: memref<6x512xf32, #tpu.memory_space<vmem>>) attributes {dimension_semantics = [#tpu.dimension_semantics<arbitrary>], iteration_bounds = array<i64: 1>, scalar_prefetch = 0 : i64, scratch_operands = 0 : i64, tpu.core_type = #tpu.core_type<tc>, window_params = [{pipeline_mode = #tpu.pipeline_mode<synchronous>, transform_indices = @transform_0, window_bounds = array<i64: 2, 3, 384>}, {pipeline_mode = #tpu.pipeline_mode<synchronous>, transform_indices = @transform_1, window_bounds = array<i64: 6, 27>}, {pipeline_mode = #tpu.pipeline_mode<synchronous>, transform_indices = @transform_2, window_bounds = array<i64: 6, 1>}, {pipeline_mode = #tpu.pipeline_mode<synchronous>, transform_indices = @transform_3, window_bounds = array<i64: 6, 512>}]} {
    %c0 = arith.constant 0 : index
    %c0_0 = arith.constant 0 : index
    %c0_1 = arith.constant 0 : index
    %0 = vector.load %arg1[%c0, %c0_0, %c0_1] : memref<2x3x384xf32, #tpu.memory_space<vmem>>, vector<1x3x256xf32>
    %1 = vector.shape_cast %0 : vector<1x3x256xf32> to vector<3x256xf32>
    %c1 = arith.constant 1 : index
    %c0_2 = arith.constant 0 : index
    %c0_3 = arith.constant 0 : index
    %2 = vector.load %arg1[%c1, %c0_2, %c0_3] : memref<2x3x384xf32, #tpu.memory_space<vmem>>, vector<1x3x256xf32>
    %3 = vector.shape_cast %2 : vector<1x3x256xf32> to vector<3x256xf32>
    %4 = tpu.concatenate %1, %3 in 1 : vector<3x256xf32>, vector<3x256xf32> -> vector<3x512xf32>
    %c0_4 = arith.constant 0 : index
    %c0_5 = arith.constant 0 : index
    %c1_6 = arith.constant 1 : index
    %5 = vector.load %arg1[%c0_4, %c0_5, %c1_6] : memref<2x3x384xf32, #tpu.memory_space<vmem>>, vector<1x3x256xf32>
    %6 = vector.shape_cast %5 : vector<1x3x256xf32> to vector<3x256xf32>
    %c1_7 = arith.constant 1 : index
    %c0_8 = arith.constant 0 : index
    %c1_9 = arith.constant 1 : index
    %7 = vector.load %arg1[%c1_7, %c0_8, %c1_9] : memref<2x3x384xf32, #tpu.memory_space<vmem>>, vector<1x3x256xf32>
    %8 = vector.shape_cast %7 : vector<1x3x256xf32> to vector<3x256xf32>
    %9 = tpu.concatenate %6, %8 in 1 : vector<3x256xf32>, vector<3x256xf32> -> vector<3x512xf32>
    %c0_10 = arith.constant 0 : index
    %c0_11 = arith.constant 0 : index
    %c2 = arith.constant 2 : index
    %10 = vector.load %arg1[%c0_10, %c0_11, %c2] : memref<2x3x384xf32, #tpu.memory_space<vmem>>, vector<1x3x256xf32>
    %11 = vector.shape_cast %10 : vector<1x3x256xf32> to vector<3x256xf32>
    %c1_12 = arith.constant 1 : index
    %c0_13 = arith.constant 0 : index
    %c2_14 = arith.constant 2 : index
    %12 = vector.load %arg1[%c1_12, %c0_13, %c2_14] : memref<2x3x384xf32, #tpu.memory_space<vmem>>, vector<1x3x256xf32>
    %13 = vector.shape_cast %12 : vector<1x3x256xf32> to vector<3x256xf32>
    %14 = tpu.concatenate %11, %13 in 1 : vector<3x256xf32>, vector<3x256xf32> -> vector<3x512xf32>
    %c0_15 = arith.constant 0 : index
    %c0_16 = arith.constant 0 : index
    %c16 = arith.constant 16 : index
    %15 = vector.load %arg1[%c0_15, %c0_16, %c16] : memref<2x3x384xf32, #tpu.memory_space<vmem>>, vector<1x3x256xf32>
    %16 = vector.shape_cast %15 : vector<1x3x256xf32> to vector<3x256xf32>
    %c1_17 = arith.constant 1 : index
    %c0_18 = arith.constant 0 : index
    %c16_19 = arith.constant 16 : index
    %17 = vector.load %arg1[%c1_17, %c0_18, %c16_19] : memref<2x3x384xf32, #tpu.memory_space<vmem>>, vector<1x3x256xf32>
    %18 = vector.shape_cast %17 : vector<1x3x256xf32> to vector<3x256xf32>
    %19 = tpu.concatenate %16, %18 in 1 : vector<3x256xf32>, vector<3x256xf32> -> vector<3x512xf32>
    %c0_20 = arith.constant 0 : index
    %c0_21 = arith.constant 0 : index
    %c17 = arith.constant 17 : index
    %20 = vector.load %arg1[%c0_20, %c0_21, %c17] : memref<2x3x384xf32, #tpu.memory_space<vmem>>, vector<1x3x256xf32>
    %21 = vector.shape_cast %20 : vector<1x3x256xf32> to vector<3x256xf32>
    %c1_22 = arith.constant 1 : index
    %c0_23 = arith.constant 0 : index
    %c17_24 = arith.constant 17 : index
    %22 = vector.load %arg1[%c1_22, %c0_23, %c17_24] : memref<2x3x384xf32, #tpu.memory_space<vmem>>, vector<1x3x256xf32>
    %23 = vector.shape_cast %22 : vector<1x3x256xf32> to vector<3x256xf32>
    %24 = tpu.concatenate %21, %23 in 1 : vector<3x256xf32>, vector<3x256xf32> -> vector<3x512xf32>
    %c0_25 = arith.constant 0 : index
    %c0_26 = arith.constant 0 : index
    %c18 = arith.constant 18 : index
    %25 = vector.load %arg1[%c0_25, %c0_26, %c18] : memref<2x3x384xf32, #tpu.memory_space<vmem>>, vector<1x3x256xf32>
    %26 = vector.shape_cast %25 : vector<1x3x256xf32> to vector<3x256xf32>
    %c1_27 = arith.constant 1 : index
    %c0_28 = arith.constant 0 : index
    %c18_29 = arith.constant 18 : index
    %27 = vector.load %arg1[%c1_27, %c0_28, %c18_29] : memref<2x3x384xf32, #tpu.memory_space<vmem>>, vector<1x3x256xf32>
    %28 = vector.shape_cast %27 : vector<1x3x256xf32> to vector<3x256xf32>
    %29 = tpu.concatenate %26, %28 in 1 : vector<3x256xf32>, vector<3x256xf32> -> vector<3x512xf32>
    %c0_30 = arith.constant 0 : index
    %c0_31 = arith.constant 0 : index
    %c32 = arith.constant 32 : index
    %30 = vector.load %arg1[%c0_30, %c0_31, %c32] : memref<2x3x384xf32, #tpu.memory_space<vmem>>, vector<1x3x256xf32>
    %31 = vector.shape_cast %30 : vector<1x3x256xf32> to vector<3x256xf32>
    %c1_32 = arith.constant 1 : index
    %c0_33 = arith.constant 0 : index
    %c32_34 = arith.constant 32 : index
    %32 = vector.load %arg1[%c1_32, %c0_33, %c32_34] : memref<2x3x384xf32, #tpu.memory_space<vmem>>, vector<1x3x256xf32>
    %33 = vector.shape_cast %32 : vector<1x3x256xf32> to vector<3x256xf32>
    %34 = tpu.concatenate %31, %33 in 1 : vector<3x256xf32>, vector<3x256xf32> -> vector<3x512xf32>
    %c0_35 = arith.constant 0 : index
    %c0_36 = arith.constant 0 : index
    %c33 = arith.constant 33 : index
    %35 = vector.load %arg1[%c0_35, %c0_36, %c33] : memref<2x3x384xf32, #tpu.memory_space<vmem>>, vector<1x3x256xf32>
    %36 = vector.shape_cast %35 : vector<1x3x256xf32> to vector<3x256xf32>
    %c1_37 = arith.constant 1 : index
    %c0_38 = arith.constant 0 : index
    %c33_39 = arith.constant 33 : index
    %37 = vector.load %arg1[%c1_37, %c0_38, %c33_39] : memref<2x3x384xf32, #tpu.memory_space<vmem>>, vector<1x3x256xf32>
    %38 = vector.shape_cast %37 : vector<1x3x256xf32> to vector<3x256xf32>
    %39 = tpu.concatenate %36, %38 in 1 : vector<3x256xf32>, vector<3x256xf32> -> vector<3x512xf32>
    %c0_40 = arith.constant 0 : index
    %c0_41 = arith.constant 0 : index
    %c34 = arith.constant 34 : index
    %40 = vector.load %arg1[%c0_40, %c0_41, %c34] : memref<2x3x384xf32, #tpu.memory_space<vmem>>, vector<1x3x256xf32>
    %41 = vector.shape_cast %40 : vector<1x3x256xf32> to vector<3x256xf32>
    %c1_42 = arith.constant 1 : index
    %c0_43 = arith.constant 0 : index
    %c34_44 = arith.constant 34 : index
    %42 = vector.load %arg1[%c1_42, %c0_43, %c34_44] : memref<2x3x384xf32, #tpu.memory_space<vmem>>, vector<1x3x256xf32>
    %43 = vector.shape_cast %42 : vector<1x3x256xf32> to vector<3x256xf32>
    %44 = tpu.concatenate %41, %43 in 1 : vector<3x256xf32>, vector<3x256xf32> -> vector<3x512xf32>
    %45 = tpu.concatenate %4, %9, %14, %19, %24, %29, %34, %39, %44 in 0 : vector<3x512xf32>, vector<3x512xf32>, vector<3x512xf32>, vector<3x512xf32>, vector<3x512xf32>, vector<3x512xf32>, vector<3x512xf32>, vector<3x512xf32>, vector<3x512xf32> -> vector<27x512xf32>
    %c0_45 = arith.constant 0 : index
    %c0_46 = arith.constant 0 : index
    %46 = vector.load %arg2[%c0_45, %c0_46] : memref<6x27xf32, #tpu.memory_space<vmem>>, vector<6x27xf32>
    %cst = arith.constant dense<0.000000e+00> : vector<6x512xf32>
    %47 = tpu.matmul %46, %45, %cst {dimension_numbers = #tpu.dot_dimension_numbers<[1], [0], [0], [1], [0, 0, 1, 1], [], []>, precision = #tpu.contract_precision<fp32>} : vector<6x27xf32>, vector<27x512xf32>, vector<6x512xf32> -> vector<6x512xf32>
    %c0_47 = arith.constant 0 : index
    %c0_48 = arith.constant 0 : index
    %48 = vector.load %arg3[%c0_47, %c0_48] : memref<6x1xf32, #tpu.memory_space<vmem>>, vector<6x1xf32>
    %49 = vector.broadcast %48 : vector<6x1xf32> to vector<6x512xf32>
    %50 = arith.addf %47, %49 : vector<6x512xf32>
    %c0_49 = arith.constant 0 : index
    %c0_50 = arith.constant 0 : index
    %51 = vector.load %arg4[%c0_49, %c0_50] : memref<6x512xf32, #tpu.memory_space<vmem>>, vector<6x512xf32>
    tpu.vector_store %arg4[%c0_49, %c0_50], %50 {strides = array<i32>} : memref<6x512xf32, #tpu.memory_space<vmem>>, vector<6x512xf32>,
    return
  }
  func.func @transform_0(%arg0: i32) -> (i32, i32, i32) {
    %c0_i32 = arith.constant 0 : i32
    %c0_i32_0 = arith.constant 0 : i32
    %c0_i32_1 = arith.constant 0 : i32
    %c0_i32_2 = arith.constant 0 : i32
    return %c0_i32, %c0_i32_0, %c0_i32_1 : i32, i32, i32
  }
  func.func @transform_1(%arg0: i32) -> (i32, i32) {
    %c0_i32 = arith.constant 0 : i32
    %c0_i32_0 = arith.constant 0 : i32
    %c0_i32_1 = arith.constant 0 : i32
    return %c0_i32, %c0_i32_0 : i32, i32
  }
  func.func @transform_2(%arg0: i32) -> (i32, i32) {
    %c0_i32 = arith.constant 0 : i32
    %c0_i32_0 = arith.constant 0 : i32
    %c0_i32_1 = arith.constant 0 : i32
    return %c0_i32, %c0_i32_0 : i32, i32
  }
  func.func @transform_3(%arg0: i32) -> (i32, i32) {
    %c0_i32 = arith.constant 0 : i32
    %c0_i32_0 = arith.constant 0 : i32
    %c0_i32_1 = arith.constant 0 : i32
    return %c0_i32, %c0_i32_0 : i32, i32
  }
}

</mosaic_0001>

<llo_original>
// kernel: tpu_custom_call.1
$region0: #{tpu_custom_call.1}
  #allocation0 [shape = 'u32[]', space=smem, size = 0x4, offset = 0x4, fixed_abs, tag = 'smem constant byte address 0x4 - core index']
  #allocation1 [shape = 'u32[144,128]{1,0:T(1,128)}', space=vmem, size = 0x12000, scoped, tag = 'internal scratch']
  %s0 = inlined_call_operand.vmem [shape: f32[2,3,384], index: 0, kind: input, shape index: {}]
  %s1 = inlined_call_operand.vmem [shape: f32[6,27], index: 1, kind: input, shape index: {}]
  %s2 = inlined_call_operand.vmem [shape: f32[6,1], index: 2, kind: input, shape index: {}]
  %s3 = inlined_call_operand.hbm [shape: f32[6,512], index: 3, kind: output, shape index: {}]
  %s4 = sld [smem:[#allocation0]]
  $region22: #{tpu_custom_call.1} parent=0
    _
  %s6 = ssub.s32 1, %s4
  %s7 = scalar_select 0, %s6, %s4
  $region1: #{tpu_custom_call.1} parent=0
    #allocation2 [shape = 'u8[16384]{0}', space=vmem, size = 0x4000, scoped, tag = 'output window, operand 0, single buffered']
    #allocation3 [shape = 's32[1]{0}', space=sflag, size = 0x4, scoped, tag = 'scoped memory for tpu_custom_call.1']
    %8 = vsyncpa [#allocation3], 0
    // Predicated region
    $region2: #{tpu_custom_call.1} parent=1 // pred_check
      _
    $region3: #{tpu_custom_call.1} parent=1 // pred_check_branch
      %10 = sbr.rel (0) target = $region5
    $region4: #{tpu_custom_call.1} parent=1 // pred_region
      _
    $region5: #{tpu_custom_call.1} parent=1 // pred_fallthru
      _
    // Predicated region
    $region6: #{tpu_custom_call.1} parent=1 // pred_check
      _
    $region7: #{tpu_custom_call.1} parent=1 // pred_check_branch
      %12 = sbr.rel (0) target = $region9
    $region8: #{tpu_custom_call.1} parent=1 // pred_region
      _
    $region9: #{tpu_custom_call.1} parent=1 // pred_fallthru
      _
    // Predicated region
    $region10: #{tpu_custom_call.1} parent=1 // pred_check
      _
    $region11: #{tpu_custom_call.1} parent=1 // pred_check_branch
      %14 = sbr.rel (0) target = $region13
    $region12: #{tpu_custom_call.1} parent=1 // pred_region
      _
    $region13: #{tpu_custom_call.1} parent=1 // pred_fallthru
      _
    %v15 = vld [vmem:[%s0] sm:$0x77]
    %s16 = scalar_lea.vmem %s0, 12
    %v17 = vld [vmem:[%s16] sm:$0x77]
    %v19 = vcombine.high %v15, %v15
    %v22 = vcombine.high %v17, %v17
    %v24 = vld [vmem:[%s0 + $0x8] sm:$0x7]
    %v25 = vld [vmem:[%s16 + $0x8] sm:$0x7]
    %27 = vrot.lane.b32.xlu0 %v15, 127
    %v28 = vpop.permute.xlu0 %27
    %29 = vrot.lane.b32.xlu0 %v19, 127
    %v30 = vpop.permute.xlu0 %29
    %31 = vrot.lane.b32.xlu0 %v24, 127
    %v32 = vpop.permute.xlu0 %31
    %vm33 = vcmask 1039360
    %v34 = vsel %vm33, %v28, %v30
    %v35 = vsel %vm33, %v30, %v32
    %37 = vrot.lane.b32.xlu0 %v17, 127
    %v38 = vpop.permute.xlu0 %37
    %39 = vrot.lane.b32.xlu0 %v22, 127
    %v40 = vpop.permute.xlu0 %39
    %41 = vrot.lane.b32.xlu0 %v25, 127
    %v42 = vpop.permute.xlu0 %41
    %v43 = vsel %vm33, %v38, %v40
    %v44 = vsel %vm33, %v40, %v42
    %45 = vrot.lane.b32.xlu0 %v15, 126
    %v46 = vpop.permute.xlu0 %45
    %47 = vrot.lane.b32.xlu0 %v19, 126
    %v48 = vpop.permute.xlu0 %47
    %49 = vrot.lane.b32.xlu0 %v24, 126
    %v50 = vpop.permute.xlu0 %49
    %vm51 = vcmask 1031168
    %v52 = vsel %vm51, %v46, %v48
    %v53 = vsel %vm51, %v48, %v50
    %54 = vrot.lane.b32.xlu0 %v17, 126
    %v55 = vpop.permute.xlu0 %54
    %56 = vrot.lane.b32.xlu0 %v22, 126
    %v57 = vpop.permute.xlu0 %56
    %58 = vrot.lane.b32.xlu0 %v25, 126
    %v59 = vpop.permute.xlu0 %58
    %v60 = vsel %vm51, %v55, %v57
    %v61 = vsel %vm51, %v57, %v59
    %62 = vrot.lane.b32.xlu0 %v15, 112
    %v63 = vpop.permute.xlu0 %62
    %64 = vrot.lane.b32.xlu0 %v19, 112
    %v65 = vpop.permute.xlu0 %64
    %66 = vrot.lane.b32.xlu0 %v24, 112
    %v67 = vpop.permute.xlu0 %66
    %vm68 = vcmask 916480
    %v69 = vsel %vm68, %v63, %v65
    %v70 = vsel %vm68, %v65, %v67
    %71 = vrot.lane.b32.xlu0 %v17, 112
    %v72 = vpop.permute.xlu0 %71
    %73 = vrot.lane.b32.xlu0 %v22, 112
    %v74 = vpop.permute.xlu0 %73
    %75 = vrot.lane.b32.xlu0 %v25, 112
    %v76 = vpop.permute.xlu0 %75
    %v77 = vsel %vm68, %v72, %v74
    %v78 = vsel %vm68, %v74, %v76
    %79 = vrot.lane.b32.xlu0 %v15, 111
    %v80 = vpop.permute.xlu0 %79
    %81 = vrot.lane.b32.xlu0 %v19, 111
    %v82 = vpop.permute.xlu0 %81
    %83 = vrot.lane.b32.xlu0 %v24, 111
    %v84 = vpop.permute.xlu0 %83
    %vm85 = vcmask 908288
    %v86 = vsel %vm85, %v80, %v82
    %v87 = vsel %vm85, %v82, %v84
    %88 = vrot.lane.b32.xlu0 %v17, 111
    %v89 = vpop.permute.xlu0 %88
    %90 = vrot.lane.b32.xlu0 %v22, 111
    %v91 = vpop.permute.xlu0 %90
    %92 = vrot.lane.b32.xlu0 %v25, 111
    %v93 = vpop.permute.xlu0 %92
    %v94 = vsel %vm85, %v89, %v91
    %v95 = vsel %vm85, %v91, %v93
    %96 = vrot.lane.b32.xlu0 %v15, 110
    %v97 = vpop.permute.xlu0 %96
    %98 = vrot.lane.b32.xlu0 %v19, 110
    %v99 = vpop.permute.xlu0 %98
    %100 = vrot.lane.b32.xlu0 %v24, 110
    %v101 = vpop.permute.xlu0 %100
    %vm102 = vcmask 900096
    %v103 = vsel %vm102, %v97, %v99
    %v104 = vsel %vm102, %v99, %v101
    %105 = vrot.lane.b32.xlu0 %v17, 110
    %v106 = vpop.permute.xlu0 %105
    %107 = vrot.lane.b32.xlu0 %v22, 110
    %v108 = vpop.permute.xlu0 %107
    %109 = vrot.lane.b32.xlu0 %v25, 110
    %v110 = vpop.permute.xlu0 %109
    %v111 = vsel %vm102, %v106, %v108
    %v112 = vsel %vm102, %v108, %v110
    %113 = vrot.lane.b32.xlu0 %v15, 96
    %v114 = vpop.permute.xlu0 %113
    %115 = vrot.lane.b32.xlu0 %v19, 96
    %v116 = vpop.permute.xlu0 %115
    %117 = vrot.lane.b32.xlu0 %v24, 96
    %v118 = vpop.permute.xlu0 %117
    %vm119 = vcmask 785408
    %v120 = vsel %vm119, %v114, %v116
    %v121 = vsel %vm119, %v116, %v118
    %122 = vrot.lane.b32.xlu0 %v17, 96
    %v123 = vpop.permute.xlu0 %122
    %124 = vrot.lane.b32.xlu0 %v22, 96
    %v125 = vpop.permute.xlu0 %124
    %126 = vrot.lane.b32.xlu0 %v25, 96
    %v127 = vpop.permute.xlu0 %126
    %v128 = vsel %vm119, %v123, %v125
    %v129 = vsel %vm119, %v125, %v127
    %130 = vrot.lane.b32.xlu0 %v15, 95
    %v131 = vpop.permute.xlu0 %130
    %132 = vrot.lane.b32.xlu0 %v19, 95
    %v133 = vpop.permute.xlu0 %132
    %134 = vrot.lane.b32.xlu0 %v24, 95
    %v135 = vpop.permute.xlu0 %134
    %vm136 = vcmask 777216
    %v137 = vsel %vm136, %v131, %v133
    %v138 = vsel %vm136, %v133, %v135
    %139 = vrot.lane.b32.xlu0 %v17, 95
    %v140 = vpop.permute.xlu0 %139
    %141 = vrot.lane.b32.xlu0 %v22, 95
    %v142 = vpop.permute.xlu0 %141
    %143 = vrot.lane.b32.xlu0 %v25, 95
    %v144 = vpop.permute.xlu0 %143
    %v145 = vsel %vm136, %v140, %v142
    %v146 = vsel %vm136, %v142, %v144
    %147 = vrot.lane.b32.xlu0 %v15, 94
    %v148 = vpop.permute.xlu0 %147
    %149 = vrot.lane.b32.xlu0 %v19, 94
    %v150 = vpop.permute.xlu0 %149
    %151 = vrot.lane.b32.xlu0 %v24, 94
    %v152 = vpop.permute.xlu0 %151
    %vm153 = vcmask 769024
    %v154 = vsel %vm153, %v148, %v150
    %v155 = vsel %vm153, %v150, %v152
    %156 = vrot.lane.b32.xlu0 %v17, 94
    %v157 = vpop.permute.xlu0 %156
    %158 = vrot.lane.b32.xlu0 %v22, 94
    %v159 = vpop.permute.xlu0 %158
    %160 = vrot.lane.b32.xlu0 %v25, 94
    %v161 = vpop.permute.xlu0 %160
    %v162 = vsel %vm153, %v157, %v159
    %v163 = vsel %vm153, %v159, %v161
    %v164 = vrot.slane %v34, 5
    %v165 = vrot.slane %v35, 5
    %v166 = vrot.slane %v43, 5
    %v167 = vrot.slane %v44, 5
    %v172 = vrot.slane %v52, 2
    %v173 = vrot.slane %v53, 2
    %v174 = vrot.slane %v60, 2
    %v175 = vrot.slane %v61, 2
    %v180 = vrot.slane %v69, 7
    %v181 = vrot.slane %v70, 7
    %v182 = vrot.slane %v77, 7
    %v183 = vrot.slane %v78, 7
    %v188 = vrot.slane %v86, 4
    %v189 = vrot.slane %v87, 4
    %v190 = vrot.slane %v94, 4
    %v191 = vrot.slane %v95, 4
    %v196 = vrot.slane %v103, 1
    %v197 = vrot.slane %v104, 1
    %v198 = vrot.slane %v111, 1
    %v199 = vrot.slane %v112, 1
    %v204 = vrot.slane %v120, 6
    %v205 = vrot.slane %v121, 6
    %v206 = vrot.slane %v128, 6
    %v207 = vrot.slane %v129, 6
    %v212 = vrot.slane %v137, 3
    %v213 = vrot.slane %v138, 3
    %v214 = vrot.slane %v145, 3
    %v215 = vrot.slane %v146, 3
    %vm220 = vcmask 1042432
    %v221 = vsel %vm220, %v15, %v164
    %v222 = vsel %vm220, %v19, %v165
    %v223 = vsel %vm220, %v17, %v166
    %v224 = vsel %vm220, %v22, %v167
    %vm225 = vcmask 1045504
    %v226 = vsel %vm225, %v221, %v172
    %v227 = vsel %vm225, %v222, %v173
    %v228 = vsel %vm225, %v223, %v174
    %v229 = vsel %vm225, %v224, %v175
    %vm230 = vcmask 1040384
    %v231 = vsel %vm230, %v172, %v180
    %v232 = vsel %vm230, %v173, %v181
    %v233 = vsel %vm230, %v174, %v182
    %v234 = vsel %vm230, %v175, %v183
    %vm235 = vcmask 1043456
    %v236 = vsel %vm235, %v231, %v188
    %v237 = vsel %vm235, %v232, %v189
    %v238 = vsel %vm235, %v233, %v190
    %v239 = vsel %vm235, %v234, %v191
    %vm240 = vcmask 1046528
    %v241 = vsel %vm240, %v236, %v196
    %v242 = vsel %vm240, %v237, %v197
    %v243 = vsel %vm240, %v238, %v198
    %v244 = vsel %vm240, %v239, %v199
    %vm245 = vcmask 1041408
    %v246 = vsel %vm245, %v196, %v204
    %v247 = vsel %vm245, %v197, %v205
    %v248 = vsel %vm245, %v198, %v206
    %v249 = vsel %vm245, %v199, %v207
    %vm250 = vcmask 1044480
    %v251 = vsel %vm250, %v246, %v212
    %v252 = vsel %vm250, %v247, %v213
    %v253 = vsel %vm250, %v248, %v214
    %v254 = vsel %vm250, %v249, %v215
    %v255 = vld [vmem:[%s1] sm:$0x3f]
    %v256 = vld [vmem:[%s2] sm:$0x3f]
    %258 = vset.pattern.permute.xlu0 0
    %259 = vperm.xlu0 %258, %v256
    %v260 = vpop.permute.xlu0 %259
    %vm262 = vcmask 220160
    %v264 = vsel %vm262, %v255, 0
    %v266 = vsel %vm220, %v154, 0
    %v268 = vsel %vm220, %v155, 0
    %v270 = vsel %vm220, %v162, 0
    %v272 = vsel %vm220, %v163, 0
    %274 = vmatprep.subr.mxu0 0.0
    %275 = vmatpush1.msra.mxu0 0.0
    %276 = vmatprep.subr.mxu0 0.0
    %277 = vmatpush1.msra.mxu0 0.0
    %278 = vmatprep.subr.mxu0 0.0
    %279 = vmatpush1.msra.mxu0 0.0
    %280 = vmatprep.subr.mxu0 0.0
    %281 = vmatpush1.msra.mxu0 0.0
    %282 = vmatprep.subr.mxu0 0.0
    %283 = vmatpush1.msra.mxu0 0.0
    %284 = vmatprep.subr.mxu0 0.0
    %285 = vmatpush1.msra.mxu0 0.0
    %286 = vmatprep.subr.mxu0 0.0
    %287 = vmatpush1.msra.mxu0 0.0
    %288 = vmatprep.subr.mxu0 0.0
    %289 = vmatpush1.msra.mxu0 0.0
    %290 = vmatprep.subr.mxu0 0.0
    %291 = vmatpush1.msra.mxu0 0.0
    %292 = vmatprep.subr.mxu0 0.0
    %293 = vmatpush1.msra.mxu0 0.0
    %294 = vmatprep.subr.mxu0 0.0
    %295 = vmatpush1.msra.mxu0 0.0
    %296 = vmatprep.subr.mxu0 0.0
    %297 = vmatpush1.msra.mxu0 0.0
    %v298 = vand.u32 %v268, 4294901760
    %299 = vmatprep.subr.mxu0 %v298
    %v300 = vand.u32 %v266, 4294901760
    %301 = vmatpush1.msra.mxu0 %v300
    %v302 = vand.u32 %v252, 4294901760
    %303 = vmatprep.subr.mxu0 %v302
    %v304 = vand.u32 %v251, 4294901760
    %305 = vmatpush1.msra.mxu0 %v304
    %v306 = vand.u32 %v242, 4294901760
    %307 = vmatprep.subr.mxu0 %v306
    %v308 = vand.u32 %v241, 4294901760
    %309 = vmatpush1.msra.mxu0 %v308
    %v310 = vand.u32 %v227, 4294901760
    %311 = vmatprep.subr.mxu0 %v310
    %v312 = vand.u32 %v226, 4294901760
    %313 = vmatpush1.msra.mxu0 %v312
    %314 = vmatprep.subr.mxu0 0.0
    %315 = vmatpush2.msra.mxu0 0.0
    %316 = vmatprep.subr.mxu0 0.0
    %317 = vmatpush2.msra.mxu0 0.0
    %318 = vmatprep.subr.mxu0 0.0
    %319 = vmatpush2.msra.mxu0 0.0
    %320 = vmatprep.subr.mxu0 0.0
    %321 = vmatpush2.msra.mxu0 0.0
    %322 = vmatprep.subr.mxu0 0.0
    %323 = vmatpush2.msra.mxu0 0.0
    %324 = vmatprep.subr.mxu0 0.0
    %325 = vmatpush2.msra.mxu0 0.0
    %326 = vmatprep.subr.mxu0 0.0
    %327 = vmatpush2.msra.mxu0 0.0
    %328 = vmatprep.subr.mxu0 0.0
    %329 = vmatpush2.msra.mxu0 0.0
    %330 = vmatprep.subr.mxu0 0.0
    %331 = vmatpush2.msra.mxu0 0.0
    %332 = vmatprep.subr.mxu0 0.0
    %333 = vmatpush2.msra.mxu0 0.0
    %334 = vmatprep.subr.mxu0 0.0
    %335 = vmatpush2.msra.mxu0 0.0
    %336 = vmatprep.subr.mxu0 0.0
    %337 = vmatpush2.msra.mxu0 0.0
    %338 = vmatprep.subr.mxu0 0.0
    %339 = vmatpush2.msra.mxu0 0.0
    %340 = vmatprep.subr.mxu0 0.0
    %341 = vmatpush2.msra.mxu0 0.0
    %342 = vmatprep.subr.mxu0 0.0
    %343 = vmatpush2.msra.mxu0 0.0
    %344 = vmatprep.subr.mxu0 0.0
    %345 = vmatpush2.msra.mxu0 0.0
    %346 = vmatprep.mubr.f32.mxu0 0.0
    %v347 = vand.u32 %v264, 4294901760
    %v348 = vsub.f32 %v264, %v347
    %v349 = vand.u32 %v348, 4294901760
    %v350 = vsub.f32 %v348, %v349
    %v351 = vand.u32 %v350, 4294901760
    %352 = vmatmul.mubr.f32.gmra.mxu0 %v351
    %v353 = vpop.f32.mrf.mxu0
    %v354 = vadd.f32 %v260, %v353
    %v355 = vpop.f32.mrf.mxu0
    %v356 = vadd.f32 %v260, %v355
    %357 = vdwg.mxu0
    %358 = vmatprep.subr.mxu0 0.0
    %359 = vmatpush1.msra.mxu0 0.0
    %360 = vmatprep.subr.mxu0 0.0
    %361 = vmatpush1.msra.mxu0 0.0
    %362 = vmatprep.subr.mxu0 0.0
    %363 = vmatpush1.msra.mxu0 0.0
    %364 = vmatprep.subr.mxu0 0.0
    %365 = vmatpush1.msra.mxu0 0.0
    %366 = vmatprep.subr.mxu0 0.0
    %367 = vmatpush1.msra.mxu0 0.0
    %368 = vmatprep.subr.mxu0 0.0
    %369 = vmatpush1.msra.mxu0 0.0
    %370 = vmatprep.subr.mxu0 0.0
    %371 = vmatpush1.msra.mxu0 0.0
    %372 = vmatprep.subr.mxu0 0.0
    %373 = vmatpush1.msra.mxu0 0.0
    %374 = vmatprep.subr.mxu0 0.0
    %375 = vmatpush1.msra.mxu0 0.0
    %376 = vmatprep.subr.mxu0 0.0
    %377 = vmatpush1.msra.mxu0 0.0
    %378 = vmatprep.subr.mxu0 0.0
    %379 = vmatpush1.msra.mxu0 0.0
    %380 = vmatprep.subr.mxu0 0.0
    %381 = vmatpush1.msra.mxu0 0.0
    %v382 = vand.u32 %v268, 4294901760
    %v383 = vsub.f32 %v268, %v382
    %v384 = vand.u32 %v383, 4294901760
    %v385 = vsub.f32 %v383, %v384
    %v386 = vand.u32 %v385, 4294901760
    %387 = vmatprep.subr.mxu0 %v386
    %v388 = vand.u32 %v266, 4294901760
    %v389 = vsub.f32 %v266, %v388
    %v390 = vand.u32 %v389, 4294901760
    %v391 = vsub.f32 %v389, %v390
    %v392 = vand.u32 %v391, 4294901760
    %393 = vmatpush1.msra.mxu0 %v392
    %v394 = vand.u32 %v252, 4294901760
    %v395 = vsub.f32 %v252, %v394
    %v396 = vand.u32 %v395, 4294901760
    %v397 = vsub.f32 %v395, %v396
    %v398 = vand.u32 %v397, 4294901760
    %399 = vmatprep.subr.mxu0 %v398
    %v400 = vand.u32 %v251, 4294901760
    %v401 = vsub.f32 %v251, %v400
    %v402 = vand.u32 %v401, 4294901760
    %v403 = vsub.f32 %v401, %v402
    %v404 = vand.u32 %v403, 4294901760
    %405 = vmatpush1.msra.mxu0 %v404
    %v406 = vand.u32 %v242, 4294901760
    %v407 = vsub.f32 %v242, %v406
    %v408 = vand.u32 %v407, 4294901760
    %v409 = vsub.f32 %v407, %v408
    %v410 = vand.u32 %v409, 4294901760
    %411 = vmatprep.subr.mxu0 %v410
    %v412 = vand.u32 %v241, 4294901760
    %v413 = vsub.f32 %v241, %v412
    %v414 = vand.u32 %v413, 4294901760
    %v415 = vsub.f32 %v413, %v414
    %v416 = vand.u32 %v415, 4294901760
    %417 = vmatpush1.msra.mxu0 %v416
    %v418 = vand.u32 %v227, 4294901760
    %v419 = vsub.f32 %v227, %v418
    %v420 = vand.u32 %v419, 4294901760
    %v421 = vsub.f32 %v419, %v420
    %v422 = vand.u32 %v421, 4294901760
    %423 = vmatprep.subr.mxu0 %v422
    %v424 = vand.u32 %v226, 4294901760
    %v425 = vsub.f32 %v226, %v424
    %v426 = vand.u32 %v425, 4294901760
    %v427 = vsub.f32 %v425, %v426
    %v428 = vand.u32 %v427, 4294901760
    %429 = vmatpush1.msra.mxu0 %v428
    %430 = vmatprep.subr.mxu0 0.0
    %431 = vmatpush2.msra.mxu0 0.0
    %432 = vmatprep.subr.mxu0 0.0
    %433 = vmatpush2.msra.mxu0 0.0
    %434 = vmatprep.subr.mxu0 0.0
    %435 = vmatpush2.msra.mxu0 0.0
    %436 = vmatprep.subr.mxu0 0.0
    %437 = vmatpush2.msra.mxu0 0.0
    %438 = vmatprep.subr.mxu0 0.0
    %439 = vmatpush2.msra.mxu0 0.0
    %440 = vmatprep.subr.mxu0 0.0
    %441 = vmatpush2.msra.mxu0 0.0
    %442 = vmatprep.subr.mxu0 0.0
    %443 = vmatpush2.msra.mxu0 0.0
    %444 = vmatprep.subr.mxu0 0.0
    %445 = vmatpush2.msra.mxu0 0.0
    %446 = vmatprep.subr.mxu0 0.0
    %447 = vmatpush2.msra.mxu0 0.0
    %448 = vmatprep.subr.mxu0 0.0
    %449 = vmatpush2.msra.mxu0 0.0
    %450 = vmatprep.subr.mxu0 0.0
    %451 = vmatpush2.msra.mxu0 0.0
    %452 = vmatprep.subr.mxu0 0.0
    %453 = vmatpush2.msra.mxu0 0.0
    %454 = vmatprep.subr.mxu0 0.0
    %455 = vmatpush2.msra.mxu0 0.0
    %456 = vmatprep.subr.mxu0 0.0
    %457 = vmatpush2.msra.mxu0 0.0
    %458 = vmatprep.subr.mxu0 0.0
    %459 = vmatpush2.msra.mxu0 0.0
    %460 = vmatprep.subr.mxu0 0.0
    %461 = vmatpush2.msra.mxu0 0.0
    %462 = vmatprep.mubr.f32.mxu0 0.0
    %v463 = vand.u32 %v264, 4294901760
    %464 = vmatmul.mubr.f32.gmra.mxu0 %v463
    %v465 = vpop.f32.mrf.mxu0
    %v466 = vadd.f32 %v354, %v465
    %v467 = vpop.f32.mrf.mxu0
    %v468 = vadd.f32 %v356, %v467
    %469 = vdwg.mxu0
    %470 = vmatprep.subr.mxu0 0.0
    %471 = vmatpush1.msra.mxu0 0.0
    %472 = vmatprep.subr.mxu0 0.0
    %473 = vmatpush1.msra.mxu0 0.0
    %474 = vmatprep.subr.mxu0 0.0
    %475 = vmatpush1.msra.mxu0 0.0
    %476 = vmatprep.subr.mxu0 0.0
    %477 = vmatpush1.msra.mxu0 0.0
    %478 = vmatprep.subr.mxu0 0.0
    %479 = vmatpush1.msra.mxu0 0.0
    %480 = vmatprep.subr.mxu0 0.0
    %481 = vmatpush1.msra.mxu0 0.0
    %482 = vmatprep.subr.mxu0 0.0
    %483 = vmatpush1.msra.mxu0 0.0
    %484 = vmatprep.subr.mxu0 0.0
    %485 = vmatpush1.msra.mxu0 0.0
    %486 = vmatprep.subr.mxu0 0.0
    %487 = vmatpush1.msra.mxu0 0.0
    %488 = vmatprep.subr.mxu0 0.0
    %489 = vmatpush1.msra.mxu0 0.0
    %490 = vmatprep.subr.mxu0 0.0
    %491 = vmatpush1.msra.mxu0 0.0
    %492 = vmatprep.subr.mxu0 0.0
    %493 = vmatpush1.msra.mxu0 0.0
    %v494 = vand.u32 %v268, 4294901760
    %v495 = vsub.f32 %v268, %v494
    %496 = vmatprep.subr.mxu0 %v495
    %v497 = vand.u32 %v266, 4294901760
    %v498 = vsub.f32 %v266, %v497
    %499 = vmatpush1.msra.mxu0 %v498
    %v500 = vand.u32 %v252, 4294901760
    %v501 = vsub.f32 %v252, %v500
    %502 = vmatprep.subr.mxu0 %v501
    %v503 = vand.u32 %v251, 4294901760
    %v504 = vsub.f32 %v251, %v503
    %505 = vmatpush1.msra.mxu0 %v504
    %v506 = vand.u32 %v242, 4294901760
    %v507 = vsub.f32 %v242, %v506
    %508 = vmatprep.subr.mxu0 %v507
    %v509 = vand.u32 %v241, 4294901760
    %v510 = vsub.f32 %v241, %v509
    %511 = vmatpush1.msra.mxu0 %v510
    %v512 = vand.u32 %v227, 4294901760
    %v513 = vsub.f32 %v227, %v512
    %514 = vmatprep.subr.mxu0 %v513
    %v515 = vand.u32 %v226, 4294901760
    %v516 = vsub.f32 %v226, %v515
    %517 = vmatpush1.msra.mxu0 %v516
    %518 = vmatprep.subr.mxu0 0.0
    %519 = vmatpush2.msra.mxu0 0.0
    %520 = vmatprep.subr.mxu0 0.0
    %521 = vmatpush2.msra.mxu0 0.0
    %522 = vmatprep.subr.mxu0 0.0
    %523 = vmatpush2.msra.mxu0 0.0
    %524 = vmatprep.subr.mxu0 0.0
    %525 = vmatpush2.msra.mxu0 0.0
    %526 = vmatprep.subr.mxu0 0.0
    %527 = vmatpush2.msra.mxu0 0.0
    %528 = vmatprep.subr.mxu0 0.0
    %529 = vmatpush2.msra.mxu0 0.0
    %530 = vmatprep.subr.mxu0 0.0
    %531 = vmatpush2.msra.mxu0 0.0
    %532 = vmatprep.subr.mxu0 0.0
    %533 = vmatpush2.msra.mxu0 0.0
    %534 = vmatprep.subr.mxu0 0.0
    %535 = vmatpush2.msra.mxu0 0.0
    %536 = vmatprep.subr.mxu0 0.0
    %537 = vmatpush2.msra.mxu0 0.0
    %538 = vmatprep.subr.mxu0 0.0
    %539 = vmatpush2.msra.mxu0 0.0
    %540 = vmatprep.subr.mxu0 0.0
    %541 = vmatpush2.msra.mxu0 0.0
    %542 = vmatprep.subr.mxu0 0.0
    %543 = vmatpush2.msra.mxu0 0.0
    %544 = vmatprep.subr.mxu0 0.0
    %545 = vmatpush2.msra.mxu0 0.0
    %546 = vmatprep.subr.mxu0 0.0
    %547 = vmatpush2.msra.mxu0 0.0
    %548 = vmatprep.subr.mxu0 0.0
    %549 = vmatpush2.msra.mxu0 0.0
    %550 = vmatprep.mubr.f32.mxu0 0.0
    %v551 = vand.u32 %v264, 4294901760
    %v552 = vsub.f32 %v264, %v551
    %553 = vmatmul.mubr.f32.gmra.mxu0 %v552
    %v554 = vpop.f32.mrf.mxu0
    %v555 = vadd.f32 %v466, %v554
    %v556 = vpop.f32.mrf.mxu0
    %v557 = vadd.f32 %v468, %v556
    %558 = vdwg.mxu0
    %559 = vmatprep.subr.mxu0 0.0
    %560 = vmatpush1.msra.mxu0 0.0
    %561 = vmatprep.subr.mxu0 0.0
    %562 = vmatpush1.msra.mxu0 0.0
    %563 = vmatprep.subr.mxu0 0.0
    %564 = vmatpush1.msra.mxu0 0.0
    %565 = vmatprep.subr.mxu0 0.0
    %566 = vmatpush1.msra.mxu0 0.0
    %567 = vmatprep.subr.mxu0 0.0
    %568 = vmatpush1.msra.mxu0 0.0
    %569 = vmatprep.subr.mxu0 0.0
    %570 = vmatpush1.msra.mxu0 0.0
    %571 = vmatprep.subr.mxu0 0.0
    %572 = vmatpush1.msra.mxu0 0.0
    %573 = vmatprep.subr.mxu0 0.0
    %574 = vmatpush1.msra.mxu0 0.0
    %575 = vmatprep.subr.mxu0 0.0
    %576 = vmatpush1.msra.mxu0 0.0
    %577 = vmatprep.subr.mxu0 0.0
    %578 = vmatpush1.msra.mxu0 0.0
    %579 = vmatprep.subr.mxu0 0.0
    %580 = vmatpush1.msra.mxu0 0.0
    %581 = vmatprep.subr.mxu0 0.0
    %582 = vmatpush1.msra.mxu0 0.0
    %v583 = vand.u32 %v268, 4294901760
    %584 = vmatprep.subr.mxu0 %v583
    %v585 = vand.u32 %v266, 4294901760
    %586 = vmatpush1.msra.mxu0 %v585
    %v587 = vand.u32 %v252, 4294901760
    %588 = vmatprep.subr.mxu0 %v587
    %v589 = vand.u32 %v251, 4294901760
    %590 = vmatpush1.msra.mxu0 %v589
    %v591 = vand.u32 %v242, 4294901760
    %592 = vmatprep.subr.mxu0 %v591
    %v593 = vand.u32 %v241, 4294901760
    %594 = vmatpush1.msra.mxu0 %v593
    %v595 = vand.u32 %v227, 4294901760
    %596 = vmatprep.subr.mxu0 %v595
    %v597 = vand.u32 %v226, 4294901760
    %598 = vmatpush1.msra.mxu0 %v597
    %599 = vmatprep.subr.mxu0 0.0
    %600 = vmatpush2.msra.mxu0 0.0
    %601 = vmatprep.subr.mxu0 0.0
    %602 = vmatpush2.msra.mxu0 0.0
    %603 = vmatprep.subr.mxu0 0.0
    %604 = vmatpush2.msra.mxu0 0.0
    %605 = vmatprep.subr.mxu0 0.0
    %606 = vmatpush2.msra.mxu0 0.0
    %607 = vmatprep.subr.mxu0 0.0
    %608 = vmatpush2.msra.mxu0 0.0
    %609 = vmatprep.subr.mxu0 0.0
    %610 = vmatpush2.msra.mxu0 0.0
    %611 = vmatprep.subr.mxu0 0.0
    %612 = vmatpush2.msra.mxu0 0.0
    %613 = vmatprep.subr.mxu0 0.0
    %614 = vmatpush2.msra.mxu0 0.0
    %615 = vmatprep.subr.mxu0 0.0
    %616 = vmatpush2.msra.mxu0 0.0
    %617 = vmatprep.subr.mxu0 0.0
    %618 = vmatpush2.msra.mxu0 0.0
    %619 = vmatprep.subr.mxu0 0.0
    %620 = vmatpush2.msra.mxu0 0.0
    %621 = vmatprep.subr.mxu0 0.0
    %622 = vmatpush2.msra.mxu0 0.0
    %623 = vmatprep.subr.mxu0 0.0
    %624 = vmatpush2.msra.mxu0 0.0
    %625 = vmatprep.subr.mxu0 0.0
    %626 = vmatpush2.msra.mxu0 0.0
    %627 = vmatprep.subr.mxu0 0.0
    %628 = vmatpush2.msra.mxu0 0.0
    %629 = vmatprep.subr.mxu0 0.0
    %630 = vmatpush2.msra.mxu0 0.0
    %631 = vmatprep.mubr.f32.mxu0 0.0
    %v632 = vand.u32 %v264, 4294901760
    %v633 = vsub.f32 %v264, %v632
    %v634 = vand.u32 %v633, 4294901760
    %635 = vmatmul.mubr.f32.gmra.mxu0 %v634
    %v636 = vpop.f32.mrf.mxu0
    %v637 = vadd.f32 %v555, %v636
    %v638 = vpop.f32.mrf.mxu0
    %v639 = vadd.f32 %v557, %v638
    %640 = vdwg.mxu0
    %641 = vmatprep.subr.mxu0 0.0
    %642 = vmatpush1.msra.mxu0 0.0
    %643 = vmatprep.subr.mxu0 0.0
    %644 = vmatpush1.msra.mxu0 0.0
    %645 = vmatprep.subr.mxu0 0.0
    %646 = vmatpush1.msra.mxu0 0.0
    %647 = vmatprep.subr.mxu0 0.0
    %648 = vmatpush1.msra.mxu0 0.0
    %649 = vmatprep.subr.mxu0 0.0
    %650 = vmatpush1.msra.mxu0 0.0
    %651 = vmatprep.subr.mxu0 0.0
    %652 = vmatpush1.msra.mxu0 0.0
    %653 = vmatprep.subr.mxu0 0.0
    %654 = vmatpush1.msra.mxu0 0.0
    %655 = vmatprep.subr.mxu0 0.0
    %656 = vmatpush1.msra.mxu0 0.0
    %657 = vmatprep.subr.mxu0 0.0
    %658 = vmatpush1.msra.mxu0 0.0
    %659 = vmatprep.subr.mxu0 0.0
    %660 = vmatpush1.msra.mxu0 0.0
    %661 = vmatprep.subr.mxu0 0.0
    %662 = vmatpush1.msra.mxu0 0.0
    %663 = vmatprep.subr.mxu0 0.0
    %664 = vmatpush1.msra.mxu0 0.0
    %v665 = vand.u32 %v268, 4294901760
    %v666 = vsub.f32 %v268, %v665
    %v667 = vand.u32 %v666, 4294901760
    %668 = vmatprep.subr.mxu0 %v667
    %v669 = vand.u32 %v266, 4294901760
    %v670 = vsub.f32 %v266, %v669
    %v671 = vand.u32 %v670, 4294901760
    %672 = vmatpush1.msra.mxu0 %v671
    %v673 = vand.u32 %v252, 4294901760
    %v674 = vsub.f32 %v252, %v673
    %v675 = vand.u32 %v674, 4294901760
    %676 = vmatprep.subr.mxu0 %v675
    %v677 = vand.u32 %v251, 4294901760
    %v678 = vsub.f32 %v251, %v677
    %v679 = vand.u32 %v678, 4294901760
    %680 = vmatpush1.msra.mxu0 %v679
    %v681 = vand.u32 %v242, 4294901760
    %v682 = vsub.f32 %v242, %v681
    %v683 = vand.u32 %v682, 4294901760
    %684 = vmatprep.subr.mxu0 %v683
    %v685 = vand.u32 %v241, 4294901760
    %v686 = vsub.f32 %v241, %v685
    %v687 = vand.u32 %v686, 4294901760
    %688 = vmatpush1.msra.mxu0 %v687
    %v689 = vand.u32 %v227, 4294901760
    %v690 = vsub.f32 %v227, %v689
    %v691 = vand.u32 %v690, 4294901760
    %692 = vmatprep.subr.mxu0 %v691
    %v693 = vand.u32 %v226, 4294901760
    %v694 = vsub.f32 %v226, %v693
    %v695 = vand.u32 %v694, 4294901760
    %696 = vmatpush1.msra.mxu0 %v695
    %697 = vmatprep.subr.mxu0 0.0
    %698 = vmatpush2.msra.mxu0 0.0
    %699 = vmatprep.subr.mxu0 0.0
    %700 = vmatpush2.msra.mxu0 0.0
    %701 = vmatprep.subr.mxu0 0.0
    %702 = vmatpush2.msra.mxu0 0.0
    %703 = vmatprep.subr.mxu0 0.0
    %704 = vmatpush2.msra.mxu0 0.0
    %705 = vmatprep.subr.mxu0 0.0
    %706 = vmatpush2.msra.mxu0 0.0
    %707 = vmatprep.subr.mxu0 0.0
    %708 = vmatpush2.msra.mxu0 0.0
    %709 = vmatprep.subr.mxu0 0.0
    %710 = vmatpush2.msra.mxu0 0.0
    %711 = vmatprep.subr.mxu0 0.0
    %712 = vmatpush2.msra.mxu0 0.0
    %713 = vmatprep.subr.mxu0 0.0
    %714 = vmatpush2.msra.mxu0 0.0
    %715 = vmatprep.subr.mxu0 0.0
    %716 = vmatpush2.msra.mxu0 0.0
    %717 = vmatprep.subr.mxu0 0.0
    %718 = vmatpush2.msra.mxu0 0.0
    %719 = vmatprep.subr.mxu0 0.0
    %720 = vmatpush2.msra.mxu0 0.0
    %721 = vmatprep.subr.mxu0 0.0
    %722 = vmatpush2.msra.mxu0 0.0
    %723 = vmatprep.subr.mxu0 0.0
    %724 = vmatpush2.msra.mxu0 0.0
    %725 = vmatprep.subr.mxu0 0.0
    %726 = vmatpush2.msra.mxu0 0.0
    %727 = vmatprep.subr.mxu0 0.0
    %728 = vmatpush2.msra.mxu0 0.0
    %729 = vmatprep.mubr.f32.mxu0 0.0
    %v730 = vand.u32 %v264, 4294901760
    %731 = vmatmul.mubr.f32.gmra.mxu0 %v730
    %v732 = vpop.f32.mrf.mxu0
    %v733 = vadd.f32 %v637, %v732
    %v734 = vpop.f32.mrf.mxu0
    %v735 = vadd.f32 %v639, %v734
    %736 = vdwg.mxu0
    %737 = vmatprep.subr.mxu0 0.0
    %738 = vmatpush1.msra.mxu0 0.0
    %739 = vmatprep.subr.mxu0 0.0
    %740 = vmatpush1.msra.mxu0 0.0
    %741 = vmatprep.subr.mxu0 0.0
    %742 = vmatpush1.msra.mxu0 0.0
    %743 = vmatprep.subr.mxu0 0.0
    %744 = vmatpush1.msra.mxu0 0.0
    %745 = vmatprep.subr.mxu0 0.0
    %746 = vmatpush1.msra.mxu0 0.0
    %747 = vmatprep.subr.mxu0 0.0
    %748 = vmatpush1.msra.mxu0 0.0
    %749 = vmatprep.subr.mxu0 0.0
    %750 = vmatpush1.msra.mxu0 0.0
    %751 = vmatprep.subr.mxu0 0.0
    %752 = vmatpush1.msra.mxu0 0.0
    %753 = vmatprep.subr.mxu0 0.0
    %754 = vmatpush1.msra.mxu0 0.0
    %755 = vmatprep.subr.mxu0 0.0
    %756 = vmatpush1.msra.mxu0 0.0
    %757 = vmatprep.subr.mxu0 0.0
    %758 = vmatpush1.msra.mxu0 0.0
    %759 = vmatprep.subr.mxu0 0.0
    %760 = vmatpush1.msra.mxu0 0.0
    %v761 = vand.u32 %v268, 4294901760
    %762 = vmatprep.subr.mxu0 %v761
    %v763 = vand.u32 %v266, 4294901760
    %764 = vmatpush1.msra.mxu0 %v763
    %v765 = vand.u32 %v252, 4294901760
    %766 = vmatprep.subr.mxu0 %v765
    %v767 = vand.u32 %v251, 4294901760
    %768 = vmatpush1.msra.mxu0 %v767
    %v769 = vand.u32 %v242, 4294901760
    %770 = vmatprep.subr.mxu0 %v769
    %v771 = vand.u32 %v241, 4294901760
    %772 = vmatpush1.msra.mxu0 %v771
    %v773 = vand.u32 %v227, 4294901760
    %774 = vmatprep.subr.mxu0 %v773
    %v775 = vand.u32 %v226, 4294901760
    %776 = vmatpush1.msra.mxu0 %v775
    %777 = vmatprep.subr.mxu0 0.0
    %778 = vmatpush2.msra.mxu0 0.0
    %779 = vmatprep.subr.mxu0 0.0
    %780 = vmatpush2.msra.mxu0 0.0
    %781 = vmatprep.subr.mxu0 0.0
    %782 = vmatpush2.msra.mxu0 0.0
    %783 = vmatprep.subr.mxu0 0.0
    %784 = vmatpush2.msra.mxu0 0.0
    %785 = vmatprep.subr.mxu0 0.0
    %786 = vmatpush2.msra.mxu0 0.0
    %787 = vmatprep.subr.mxu0 0.0
    %788 = vmatpush2.msra.mxu0 0.0
    %789 = vmatprep.subr.mxu0 0.0
    %790 = vmatpush2.msra.mxu0 0.0
    %791 = vmatprep.subr.mxu0 0.0
    %792 = vmatpush2.msra.mxu0 0.0
    %793 = vmatprep.subr.mxu0 0.0
    %794 = vmatpush2.msra.mxu0 0.0
    %795 = vmatprep.subr.mxu0 0.0
    %796 = vmatpush2.msra.mxu0 0.0
    %797 = vmatprep.subr.mxu0 0.0
    %798 = vmatpush2.msra.mxu0 0.0
    %799 = vmatprep.subr.mxu0 0.0
    %800 = vmatpush2.msra.mxu0 0.0
    %801 = vmatprep.subr.mxu0 0.0
    %802 = vmatpush2.msra.mxu0 0.0
    %803 = vmatprep.subr.mxu0 0.0
    %804 = vmatpush2.msra.mxu0 0.0
    %805 = vmatprep.subr.mxu0 0.0
    %806 = vmatpush2.msra.mxu0 0.0
    %807 = vmatprep.subr.mxu0 0.0
    %808 = vmatpush2.msra.mxu0 0.0
    %809 = vmatprep.mubr.f32.mxu0 0.0
    %v810 = vand.u32 %v264, 4294901760
    %811 = vmatmul.mubr.f32.gmra.mxu0 %v810
    %v812 = vpop.f32.mrf.mxu0
    %v813 = vadd.f32 %v733, %v812
    %v814 = vpop.f32.mrf.mxu0
    %v815 = vadd.f32 %v735, %v814
    %816 = vdwg.mxu0
    %817 = vmatprep.subr.mxu0 0.0
    %818 = vmatpush1.msra.mxu0 0.0
    %819 = vmatprep.subr.mxu0 0.0
    %820 = vmatpush1.msra.mxu0 0.0
    %821 = vmatprep.subr.mxu0 0.0
    %822 = vmatpush1.msra.mxu0 0.0
    %823 = vmatprep.subr.mxu0 0.0
    %824 = vmatpush1.msra.mxu0 0.0
    %825 = vmatprep.subr.mxu0 0.0
    %826 = vmatpush1.msra.mxu0 0.0
    %827 = vmatprep.subr.mxu0 0.0
    %828 = vmatpush1.msra.mxu0 0.0
    %829 = vmatprep.subr.mxu0 0.0
    %830 = vmatpush1.msra.mxu0 0.0
    %831 = vmatprep.subr.mxu0 0.0
    %832 = vmatpush1.msra.mxu0 0.0
    %833 = vmatprep.subr.mxu0 0.0
    %834 = vmatpush1.msra.mxu0 0.0
    %835 = vmatprep.subr.mxu0 0.0
    %836 = vmatpush1.msra.mxu0 0.0
    %837 = vmatprep.subr.mxu0 0.0
    %838 = vmatpush1.msra.mxu0 0.0
    %839 = vmatprep.subr.mxu0 0.0
    %840 = vmatpush1.msra.mxu0 0.0
    %v841 = vand.u32 %v272, 4294901760
    %842 = vmatprep.subr.mxu0 %v841
    %v843 = vand.u32 %v270, 4294901760
    %844 = vmatpush1.msra.mxu0 %v843
    %v845 = vand.u32 %v254, 4294901760
    %846 = vmatprep.subr.mxu0 %v845
    %v847 = vand.u32 %v253, 4294901760
    %848 = vmatpush1.msra.mxu0 %v847
    %v849 = vand.u32 %v244, 4294901760
    %850 = vmatprep.subr.mxu0 %v849
    %v851 = vand.u32 %v243, 4294901760
    %852 = vmatpush1.msra.mxu0 %v851
    %v853 = vand.u32 %v229, 4294901760
    %854 = vmatprep.subr.mxu0 %v853
    %v855 = vand.u32 %v228, 4294901760
    %856 = vmatpush1.msra.mxu0 %v855
    %857 = vmatprep.subr.mxu0 0.0
    %858 = vmatpush2.msra.mxu0 0.0
    %859 = vmatprep.subr.mxu0 0.0
    %860 = vmatpush2.msra.mxu0 0.0
    %861 = vmatprep.subr.mxu0 0.0
    %862 = vmatpush2.msra.mxu0 0.0
    %863 = vmatprep.subr.mxu0 0.0
    %864 = vmatpush2.msra.mxu0 0.0
    %865 = vmatprep.subr.mxu0 0.0
    %866 = vmatpush2.msra.mxu0 0.0
    %867 = vmatprep.subr.mxu0 0.0
    %868 = vmatpush2.msra.mxu0 0.0
    %869 = vmatprep.subr.mxu0 0.0
    %870 = vmatpush2.msra.mxu0 0.0
    %871 = vmatprep.subr.mxu0 0.0
    %872 = vmatpush2.msra.mxu0 0.0
    %873 = vmatprep.subr.mxu0 0.0
    %874 = vmatpush2.msra.mxu0 0.0
    %875 = vmatprep.subr.mxu0 0.0
    %876 = vmatpush2.msra.mxu0 0.0
    %877 = vmatprep.subr.mxu0 0.0
    %878 = vmatpush2.msra.mxu0 0.0
    %879 = vmatprep.subr.mxu0 0.0
    %880 = vmatpush2.msra.mxu0 0.0
    %881 = vmatprep.subr.mxu0 0.0
    %882 = vmatpush2.msra.mxu0 0.0
    %883 = vmatprep.subr.mxu0 0.0
    %884 = vmatpush2.msra.mxu0 0.0
    %885 = vmatprep.subr.mxu0 0.0
    %886 = vmatpush2.msra.mxu0 0.0
    %887 = vmatprep.subr.mxu0 0.0
    %888 = vmatpush2.msra.mxu0 0.0
    %889 = vmatprep.mubr.f32.mxu0 0.0
    %v890 = vand.u32 %v264, 4294901760
    %v891 = vsub.f32 %v264, %v890
    %v892 = vand.u32 %v891, 4294901760
    %v893 = vsub.f32 %v891, %v892
    %v894 = vand.u32 %v893, 4294901760
    %895 = vmatmul.mubr.f32.gmra.mxu0 %v894
    %v896 = vpop.f32.mrf.mxu0
    %v897 = vadd.f32 %v260, %v896
    %v898 = vpop.f32.mrf.mxu0
    %v899 = vadd.f32 %v260, %v898
    %900 = vdwg.mxu0
    %901 = vmatprep.subr.mxu0 0.0
    %902 = vmatpush1.msra.mxu0 0.0
    %903 = vmatprep.subr.mxu0 0.0
    %904 = vmatpush1.msra.mxu0 0.0
    %905 = vmatprep.subr.mxu0 0.0
    %906 = vmatpush1.msra.mxu0 0.0
    %907 = vmatprep.subr.mxu0 0.0
    %908 = vmatpush1.msra.mxu0 0.0
    %909 = vmatprep.subr.mxu0 0.0
    %910 = vmatpush1.msra.mxu0 0.0
    %911 = vmatprep.subr.mxu0 0.0
    %912 = vmatpush1.msra.mxu0 0.0
    %913 = vmatprep.subr.mxu0 0.0
    %914 = vmatpush1.msra.mxu0 0.0
    %915 = vmatprep.subr.mxu0 0.0
    %916 = vmatpush1.msra.mxu0 0.0
    %917 = vmatprep.subr.mxu0 0.0
    %918 = vmatpush1.msra.mxu0 0.0
    %919 = vmatprep.subr.mxu0 0.0
    %920 = vmatpush1.msra.mxu0 0.0
    %921 = vmatprep.subr.mxu0 0.0
    %922 = vmatpush1.msra.mxu0 0.0
    %923 = vmatprep.subr.mxu0 0.0
    %924 = vmatpush1.msra.mxu0 0.0
    %v925 = vand.u32 %v272, 4294901760
    %v926 = vsub.f32 %v272, %v925
    %v927 = vand.u32 %v926, 4294901760
    %v928 = vsub.f32 %v926, %v927
    %v929 = vand.u32 %v928, 4294901760
    %930 = vmatprep.subr.mxu0 %v929
    %v931 = vand.u32 %v270, 4294901760
    %v932 = vsub.f32 %v270, %v931
    %v933 = vand.u32 %v932, 4294901760
    %v934 = vsub.f32 %v932, %v933
    %v935 = vand.u32 %v934, 4294901760
    %936 = vmatpush1.msra.mxu0 %v935
    %v937 = vand.u32 %v254, 4294901760
    %v938 = vsub.f32 %v254, %v937
    %v939 = vand.u32 %v938, 4294901760
    %v940 = vsub.f32 %v938, %v939
    %v941 = vand.u32 %v940, 4294901760
    %942 = vmatprep.subr.mxu0 %v941
    %v943 = vand.u32 %v253, 4294901760
    %v944 = vsub.f32 %v253, %v943
    %v945 = vand.u32 %v944, 4294901760
    %v946 = vsub.f32 %v944, %v945
    %v947 = vand.u32 %v946, 4294901760
    %948 = vmatpush1.msra.mxu0 %v947
    %v949 = vand.u32 %v244, 4294901760
    %v950 = vsub.f32 %v244, %v949
    %v951 = vand.u32 %v950, 4294901760
    %v952 = vsub.f32 %v950, %v951
    %v953 = vand.u32 %v952, 4294901760
    %954 = vmatprep.subr.mxu0 %v953
    %v955 = vand.u32 %v243, 4294901760
    %v956 = vsub.f32 %v243, %v955
    %v957 = vand.u32 %v956, 4294901760
    %v958 = vsub.f32 %v956, %v957
    %v959 = vand.u32 %v958, 4294901760
    %960 = vmatpush1.msra.mxu0 %v959
    %v961 = vand.u32 %v229, 4294901760
    %v962 = vsub.f32 %v229, %v961
    %v963 = vand.u32 %v962, 4294901760
    %v964 = vsub.f32 %v962, %v963
    %v965 = vand.u32 %v964, 4294901760
    %966 = vmatprep.subr.mxu0 %v965
    %v967 = vand.u32 %v228, 4294901760
    %v968 = vsub.f32 %v228, %v967
    %v969 = vand.u32 %v968, 4294901760
    %v970 = vsub.f32 %v968, %v969
    %v971 = vand.u32 %v970, 4294901760
    %972 = vmatpush1.msra.mxu0 %v971
    %973 = vmatprep.subr.mxu0 0.0
    %974 = vmatpush2.msra.mxu0 0.0
    %975 = vmatprep.subr.mxu0 0.0
    %976 = vmatpush2.msra.mxu0 0.0
    %977 = vmatprep.subr.mxu0 0.0
    %978 = vmatpush2.msra.mxu0 0.0
    %979 = vmatprep.subr.mxu0 0.0
    %980 = vmatpush2.msra.mxu0 0.0
    %981 = vmatprep.subr.mxu0 0.0
    %982 = vmatpush2.msra.mxu0 0.0
    %983 = vmatprep.subr.mxu0 0.0
    %984 = vmatpush2.msra.mxu0 0.0
    %985 = vmatprep.subr.mxu0 0.0
    %986 = vmatpush2.msra.mxu0 0.0
    %987 = vmatprep.subr.mxu0 0.0
    %988 = vmatpush2.msra.mxu0 0.0
    %989 = vmatprep.subr.mxu0 0.0
    %990 = vmatpush2.msra.mxu0 0.0
    %991 = vmatprep.subr.mxu0 0.0
    %992 = vmatpush2.msra.mxu0 0.0
    %993 = vmatprep.subr.mxu0 0.0
    %994 = vmatpush2.msra.mxu0 0.0
    %995 = vmatprep.subr.mxu0 0.0
    %996 = vmatpush2.msra.mxu0 0.0
    %997 = vmatprep.subr.mxu0 0.0
    %998 = vmatpush2.msra.mxu0 0.0
    %999 = vmatprep.subr.mxu0 0.0
    %1000 = vmatpush2.msra.mxu0 0.0
    %1001 = vmatprep.subr.mxu0 0.0
    %1002 = vmatpush2.msra.mxu0 0.0
    %1003 = vmatprep.subr.mxu0 0.0
    %1004 = vmatpush2.msra.mxu0 0.0
    %1005 = vmatprep.mubr.f32.mxu0 0.0
    %v1006 = vand.u32 %v264, 4294901760
    %1007 = vmatmul.mubr.f32.gmra.mxu0 %v1006
    %v1008 = vpop.f32.mrf.mxu0
    %v1009 = vadd.f32 %v897, %v1008
    %v1010 = vpop.f32.mrf.mxu0
    %v1011 = vadd.f32 %v899, %v1010
    %1012 = vdwg.mxu0
    %1013 = vmatprep.subr.mxu0 0.0
    %1014 = vmatpush1.msra.mxu0 0.0
    %1015 = vmatprep.subr.mxu0 0.0
    %1016 = vmatpush1.msra.mxu0 0.0
    %1017 = vmatprep.subr.mxu0 0.0
    %1018 = vmatpush1.msra.mxu0 0.0
    %1019 = vmatprep.subr.mxu0 0.0
    %1020 = vmatpush1.msra.mxu0 0.0
    %1021 = vmatprep.subr.mxu0 0.0
    %1022 = vmatpush1.msra.mxu0 0.0
    %1023 = vmatprep.subr.mxu0 0.0
    %1024 = vmatpush1.msra.mxu0 0.0
    %1025 = vmatprep.subr.mxu0 0.0
    %1026 = vmatpush1.msra.mxu0 0.0
    %1027 = vmatprep.subr.mxu0 0.0
    %1028 = vmatpush1.msra.mxu0 0.0
    %1029 = vmatprep.subr.mxu0 0.0
    %1030 = vmatpush1.msra.mxu0 0.0
    %1031 = vmatprep.subr.mxu0 0.0
    %1032 = vmatpush1.msra.mxu0 0.0
    %1033 = vmatprep.subr.mxu0 0.0
    %1034 = vmatpush1.msra.mxu0 0.0
    %1035 = vmatprep.subr.mxu0 0.0
    %1036 = vmatpush1.msra.mxu0 0.0
    %v1037 = vand.u32 %v272, 4294901760
    %v1038 = vsub.f32 %v272, %v1037
    %1039 = vmatprep.subr.mxu0 %v1038
    %v1040 = vand.u32 %v270, 4294901760
    %v1041 = vsub.f32 %v270, %v1040
    %1042 = vmatpush1.msra.mxu0 %v1041
    %v1043 = vand.u32 %v254, 4294901760
    %v1044 = vsub.f32 %v254, %v1043
    %1045 = vmatprep.subr.mxu0 %v1044
    %v1046 = vand.u32 %v253, 4294901760
    %v1047 = vsub.f32 %v253, %v1046
    %1048 = vmatpush1.msra.mxu0 %v1047
    %v1049 = vand.u32 %v244, 4294901760
    %v1050 = vsub.f32 %v244, %v1049
    %1051 = vmatprep.subr.mxu0 %v1050
    %v1052 = vand.u32 %v243, 4294901760
    %v1053 = vsub.f32 %v243, %v1052
    %1054 = vmatpush1.msra.mxu0 %v1053
    %v1055 = vand.u32 %v229, 4294901760
    %v1056 = vsub.f32 %v229, %v1055
    %1057 = vmatprep.subr.mxu0 %v1056
    %v1058 = vand.u32 %v228, 4294901760
    %v1059 = vsub.f32 %v228, %v1058
    %1060 = vmatpush1.msra.mxu0 %v1059
    %1061 = vmatprep.subr.mxu0 0.0
    %1062 = vmatpush2.msra.mxu0 0.0
    %1063 = vmatprep.subr.mxu0 0.0
    %1064 = vmatpush2.msra.mxu0 0.0
    %1065 = vmatprep.subr.mxu0 0.0
    %1066 = vmatpush2.msra.mxu0 0.0
    %1067 = vmatprep.subr.mxu0 0.0
    %1068 = vmatpush2.msra.mxu0 0.0
    %1069 = vmatprep.subr.mxu0 0.0
    %1070 = vmatpush2.msra.mxu0 0.0
    %1071 = vmatprep.subr.mxu0 0.0
    %1072 = vmatpush2.msra.mxu0 0.0
    %1073 = vmatprep.subr.mxu0 0.0
    %1074 = vmatpush2.msra.mxu0 0.0
    %1075 = vmatprep.subr.mxu0 0.0
    %1076 = vmatpush2.msra.mxu0 0.0
    %1077 = vmatprep.subr.mxu0 0.0
    %1078 = vmatpush2.msra.mxu0 0.0
    %1079 = vmatprep.subr.mxu0 0.0
    %1080 = vmatpush2.msra.mxu0 0.0
    %1081 = vmatprep.subr.mxu0 0.0
    %1082 = vmatpush2.msra.mxu0 0.0
    %1083 = vmatprep.subr.mxu0 0.0
    %1084 = vmatpush2.msra.mxu0 0.0
    %1085 = vmatprep.subr.mxu0 0.0
    %1086 = vmatpush2.msra.mxu0 0.0
    %1087 = vmatprep.subr.mxu0 0.0
    %1088 = vmatpush2.msra.mxu0 0.0
    %1089 = vmatprep.subr.mxu0 0.0
    %1090 = vmatpush2.msra.mxu0 0.0
    %1091 = vmatprep.subr.mxu0 0.0
    %1092 = vmatpush2.msra.mxu0 0.0
    %1093 = vmatprep.mubr.f32.mxu0 0.0
    %v1094 = vand.u32 %v264, 4294901760
    %v1095 = vsub.f32 %v264, %v1094
    %1096 = vmatmul.mubr.f32.gmra.mxu0 %v1095
    %v1097 = vpop.f32.mrf.mxu0
    %v1098 = vadd.f32 %v1009, %v1097
    %v1099 = vpop.f32.mrf.mxu0
    %v1100 = vadd.f32 %v1011, %v1099
    %1101 = vdwg.mxu0
    %1102 = vmatprep.subr.mxu0 0.0
    %1103 = vmatpush1.msra.mxu0 0.0
    %1104 = vmatprep.subr.mxu0 0.0
    %1105 = vmatpush1.msra.mxu0 0.0
    %1106 = vmatprep.subr.mxu0 0.0
    %1107 = vmatpush1.msra.mxu0 0.0
    %1108 = vmatprep.subr.mxu0 0.0
    %1109 = vmatpush1.msra.mxu0 0.0
    %1110 = vmatprep.subr.mxu0 0.0
    %1111 = vmatpush1.msra.mxu0 0.0
    %1112 = vmatprep.subr.mxu0 0.0
    %1113 = vmatpush1.msra.mxu0 0.0
    %1114 = vmatprep.subr.mxu0 0.0
    %1115 = vmatpush1.msra.mxu0 0.0
    %1116 = vmatprep.subr.mxu0 0.0
    %1117 = vmatpush1.msra.mxu0 0.0
    %1118 = vmatprep.subr.mxu0 0.0
    %1119 = vmatpush1.msra.mxu0 0.0
    %1120 = vmatprep.subr.mxu0 0.0
    %1121 = vmatpush1.msra.mxu0 0.0
    %1122 = vmatprep.subr.mxu0 0.0
    %1123 = vmatpush1.msra.mxu0 0.0
    %1124 = vmatprep.subr.mxu0 0.0
    %1125 = vmatpush1.msra.mxu0 0.0
    %v1126 = vand.u32 %v272, 4294901760
    %1127 = vmatprep.subr.mxu0 %v1126
    %v1128 = vand.u32 %v270, 4294901760
    %1129 = vmatpush1.msra.mxu0 %v1128
    %v1130 = vand.u32 %v254, 4294901760
    %1131 = vmatprep.subr.mxu0 %v1130
    %v1132 = vand.u32 %v253, 4294901760
    %1133 = vmatpush1.msra.mxu0 %v1132
    %v1134 = vand.u32 %v244, 4294901760
    %1135 = vmatprep.subr.mxu0 %v1134
    %v1136 = vand.u32 %v243, 4294901760
    %1137 = vmatpush1.msra.mxu0 %v1136
    %v1138 = vand.u32 %v229, 4294901760
    %1139 = vmatprep.subr.mxu0 %v1138
    %v1140 = vand.u32 %v228, 4294901760
    %1141 = vmatpush1.msra.mxu0 %v1140
    %1142 = vmatprep.subr.mxu0 0.0
    %1143 = vmatpush2.msra.mxu0 0.0
    %1144 = vmatprep.subr.mxu0 0.0
    %1145 = vmatpush2.msra.mxu0 0.0
    %1146 = vmatprep.subr.mxu0 0.0
    %1147 = vmatpush2.msra.mxu0 0.0
    %1148 = vmatprep.subr.mxu0 0.0
    %1149 = vmatpush2.msra.mxu0 0.0
    %1150 = vmatprep.subr.mxu0 0.0
    %1151 = vmatpush2.msra.mxu0 0.0
    %1152 = vmatprep.subr.mxu0 0.0
    %1153 = vmatpush2.msra.mxu0 0.0
    %1154 = vmatprep.subr.mxu0 0.0
    %1155 = vmatpush2.msra.mxu0 0.0
    %1156 = vmatprep.subr.mxu0 0.0
    %1157 = vmatpush2.msra.mxu0 0.0
    %1158 = vmatprep.subr.mxu0 0.0
    %1159 = vmatpush2.msra.mxu0 0.0
    %1160 = vmatprep.subr.mxu0 0.0
    %1161 = vmatpush2.msra.mxu0 0.0
    %1162 = vmatprep.subr.mxu0 0.0
    %1163 = vmatpush2.msra.mxu0 0.0
    %1164 = vmatprep.subr.mxu0 0.0
    %1165 = vmatpush2.msra.mxu0 0.0
    %1166 = vmatprep.subr.mxu0 0.0
    %1167 = vmatpush2.msra.mxu0 0.0
    %1168 = vmatprep.subr.mxu0 0.0
    %1169 = vmatpush2.msra.mxu0 0.0
    %1170 = vmatprep.subr.mxu0 0.0
    %1171 = vmatpush2.msra.mxu0 0.0
    %1172 = vmatprep.subr.mxu0 0.0
    %1173 = vmatpush2.msra.mxu0 0.0
    %1174 = vmatprep.mubr.f32.mxu0 0.0
    %v1175 = vand.u32 %v264, 4294901760
    %v1176 = vsub.f32 %v264, %v1175
    %v1177 = vand.u32 %v1176, 4294901760
    %1178 = vmatmul.mubr.f32.gmra.mxu0 %v1177
    %v1179 = vpop.f32.mrf.mxu0
    %v1180 = vadd.f32 %v1098, %v1179
    %v1181 = vpop.f32.mrf.mxu0
    %v1182 = vadd.f32 %v1100, %v1181
    %1183 = vdwg.mxu0
    %1184 = vmatprep.subr.mxu0 0.0
    %1185 = vmatpush1.msra.mxu0 0.0
    %1186 = vmatprep.subr.mxu0 0.0
    %1187 = vmatpush1.msra.mxu0 0.0
    %1188 = vmatprep.subr.mxu0 0.0
    %1189 = vmatpush1.msra.mxu0 0.0
    %1190 = vmatprep.subr.mxu0 0.0
    %1191 = vmatpush1.msra.mxu0 0.0
    %1192 = vmatprep.subr.mxu0 0.0
    %1193 = vmatpush1.msra.mxu0 0.0
    %1194 = vmatprep.subr.mxu0 0.0
    %1195 = vmatpush1.msra.mxu0 0.0
    %1196 = vmatprep.subr.mxu0 0.0
    %1197 = vmatpush1.msra.mxu0 0.0
    %1198 = vmatprep.subr.mxu0 0.0
    %1199 = vmatpush1.msra.mxu0 0.0
    %1200 = vmatprep.subr.mxu0 0.0
    %1201 = vmatpush1.msra.mxu0 0.0
    %1202 = vmatprep.subr.mxu0 0.0
    %1203 = vmatpush1.msra.mxu0 0.0
    %1204 = vmatprep.subr.mxu0 0.0
    %1205 = vmatpush1.msra.mxu0 0.0
    %1206 = vmatprep.subr.mxu0 0.0
    %1207 = vmatpush1.msra.mxu0 0.0
    %v1208 = vand.u32 %v272, 4294901760
    %v1209 = vsub.f32 %v272, %v1208
    %v1210 = vand.u32 %v1209, 4294901760
    %1211 = vmatprep.subr.mxu0 %v1210
    %v1212 = vand.u32 %v270, 4294901760
    %v1213 = vsub.f32 %v270, %v1212
    %v1214 = vand.u32 %v1213, 4294901760
    %1215 = vmatpush1.msra.mxu0 %v1214
    %v1216 = vand.u32 %v254, 4294901760
    %v1217 = vsub.f32 %v254, %v1216
    %v1218 = vand.u32 %v1217, 4294901760
    %1219 = vmatprep.subr.mxu0 %v1218
    %v1220 = vand.u32 %v253, 4294901760
    %v1221 = vsub.f32 %v253, %v1220
    %v1222 = vand.u32 %v1221, 4294901760
    %1223 = vmatpush1.msra.mxu0 %v1222
    %v1224 = vand.u32 %v244, 4294901760
    %v1225 = vsub.f32 %v244, %v1224
    %v1226 = vand.u32 %v1225, 4294901760
    %1227 = vmatprep.subr.mxu0 %v1226
    %v1228 = vand.u32 %v243, 4294901760
    %v1229 = vsub.f32 %v243, %v1228
    %v1230 = vand.u32 %v1229, 4294901760
    %1231 = vmatpush1.msra.mxu0 %v1230
    %v1232 = vand.u32 %v229, 4294901760
    %v1233 = vsub.f32 %v229, %v1232
    %v1234 = vand.u32 %v1233, 4294901760
    %1235 = vmatprep.subr.mxu0 %v1234
    %v1236 = vand.u32 %v228, 4294901760
    %v1237 = vsub.f32 %v228, %v1236
    %v1238 = vand.u32 %v1237, 4294901760
    %1239 = vmatpush1.msra.mxu0 %v1238
    %1240 = vmatprep.subr.mxu0 0.0
    %1241 = vmatpush2.msra.mxu0 0.0
    %1242 = vmatprep.subr.mxu0 0.0
    %1243 = vmatpush2.msra.mxu0 0.0
    %1244 = vmatprep.subr.mxu0 0.0
    %1245 = vmatpush2.msra.mxu0 0.0
    %1246 = vmatprep.subr.mxu0 0.0
    %1247 = vmatpush2.msra.mxu0 0.0
    %1248 = vmatprep.subr.mxu0 0.0
    %1249 = vmatpush2.msra.mxu0 0.0
    %1250 = vmatprep.subr.mxu0 0.0
    %1251 = vmatpush2.msra.mxu0 0.0
    %1252 = vmatprep.subr.mxu0 0.0
    %1253 = vmatpush2.msra.mxu0 0.0
    %1254 = vmatprep.subr.mxu0 0.0
    %1255 = vmatpush2.msra.mxu0 0.0
    %1256 = vmatprep.subr.mxu0 0.0
    %1257 = vmatpush2.msra.mxu0 0.0
    %1258 = vmatprep.subr.mxu0 0.0
    %1259 = vmatpush2.msra.mxu0 0.0
    %1260 = vmatprep.subr.mxu0 0.0
    %1261 = vmatpush2.msra.mxu0 0.0
    %1262 = vmatprep.subr.mxu0 0.0
    %1263 = vmatpush2.msra.mxu0 0.0
    %1264 = vmatprep.subr.mxu0 0.0
    %1265 = vmatpush2.msra.mxu0 0.0
    %1266 = vmatprep.subr.mxu0 0.0
    %1267 = vmatpush2.msra.mxu0 0.0
    %1268 = vmatprep.subr.mxu0 0.0
    %1269 = vmatpush2.msra.mxu0 0.0
    %1270 = vmatprep.subr.mxu0 0.0
    %1271 = vmatpush2.msra.mxu0 0.0
    %1272 = vmatprep.mubr.f32.mxu0 0.0
    %v1273 = vand.u32 %v264, 4294901760
    %1274 = vmatmul.mubr.f32.gmra.mxu0 %v1273
    %v1275 = vpop.f32.mrf.mxu0
    %v1276 = vadd.f32 %v1180, %v1275
    %v1277 = vpop.f32.mrf.mxu0
    %v1278 = vadd.f32 %v1182, %v1277
    %1279 = vdwg.mxu0
    %1280 = vmatprep.subr.mxu0 0.0
    %1281 = vmatpush1.msra.mxu0 0.0
    %1282 = vmatprep.subr.mxu0 0.0
    %1283 = vmatpush1.msra.mxu0 0.0
    %1284 = vmatprep.subr.mxu0 0.0
    %1285 = vmatpush1.msra.mxu0 0.0
    %1286 = vmatprep.subr.mxu0 0.0
    %1287 = vmatpush1.msra.mxu0 0.0
    %1288 = vmatprep.subr.mxu0 0.0
    %1289 = vmatpush1.msra.mxu0 0.0
    %1290 = vmatprep.subr.mxu0 0.0
    %1291 = vmatpush1.msra.mxu0 0.0
    %1292 = vmatprep.subr.mxu0 0.0
    %1293 = vmatpush1.msra.mxu0 0.0
    %1294 = vmatprep.subr.mxu0 0.0
    %1295 = vmatpush1.msra.mxu0 0.0
    %1296 = vmatprep.subr.mxu0 0.0
    %1297 = vmatpush1.msra.mxu0 0.0
    %1298 = vmatprep.subr.mxu0 0.0
    %1299 = vmatpush1.msra.mxu0 0.0
    %1300 = vmatprep.subr.mxu0 0.0
    %1301 = vmatpush1.msra.mxu0 0.0
    %1302 = vmatprep.subr.mxu0 0.0
    %1303 = vmatpush1.msra.mxu0 0.0
    %v1304 = vand.u32 %v272, 4294901760
    %1305 = vmatprep.subr.mxu0 %v1304
    %v1306 = vand.u32 %v270, 4294901760
    %1307 = vmatpush1.msra.mxu0 %v1306
    %v1308 = vand.u32 %v254, 4294901760
    %1309 = vmatprep.subr.mxu0 %v1308
    %v1310 = vand.u32 %v253, 4294901760
    %1311 = vmatpush1.msra.mxu0 %v1310
    %v1312 = vand.u32 %v244, 4294901760
    %1313 = vmatprep.subr.mxu0 %v1312
    %v1314 = vand.u32 %v243, 4294901760
    %1315 = vmatpush1.msra.mxu0 %v1314
    %v1316 = vand.u32 %v229, 4294901760
    %1317 = vmatprep.subr.mxu0 %v1316
    %v1318 = vand.u32 %v228, 4294901760
    %1319 = vmatpush1.msra.mxu0 %v1318
    %1320 = vmatprep.subr.mxu0 0.0
    %1321 = vmatpush2.msra.mxu0 0.0
    %1322 = vmatprep.subr.mxu0 0.0
    %1323 = vmatpush2.msra.mxu0 0.0
    %1324 = vmatprep.subr.mxu0 0.0
    %1325 = vmatpush2.msra.mxu0 0.0
    %1326 = vmatprep.subr.mxu0 0.0
    %1327 = vmatpush2.msra.mxu0 0.0
    %1328 = vmatprep.subr.mxu0 0.0
    %1329 = vmatpush2.msra.mxu0 0.0
    %1330 = vmatprep.subr.mxu0 0.0
    %1331 = vmatpush2.msra.mxu0 0.0
    %1332 = vmatprep.subr.mxu0 0.0
    %1333 = vmatpush2.msra.mxu0 0.0
    %1334 = vmatprep.subr.mxu0 0.0
    %1335 = vmatpush2.msra.mxu0 0.0
    %1336 = vmatprep.subr.mxu0 0.0
    %1337 = vmatpush2.msra.mxu0 0.0
    %1338 = vmatprep.subr.mxu0 0.0
    %1339 = vmatpush2.msra.mxu0 0.0
    %1340 = vmatprep.subr.mxu0 0.0
    %1341 = vmatpush2.msra.mxu0 0.0
    %1342 = vmatprep.subr.mxu0 0.0
    %1343 = vmatpush2.msra.mxu0 0.0
    %1344 = vmatprep.subr.mxu0 0.0
    %1345 = vmatpush2.msra.mxu0 0.0
    %1346 = vmatprep.subr.mxu0 0.0
    %1347 = vmatpush2.msra.mxu0 0.0
    %1348 = vmatprep.subr.mxu0 0.0
    %1349 = vmatpush2.msra.mxu0 0.0
    %1350 = vmatprep.subr.mxu0 0.0
    %1351 = vmatpush2.msra.mxu0 0.0
    %1352 = vmatprep.mubr.f32.mxu0 0.0
    %v1353 = vand.u32 %v264, 4294901760
    %1354 = vmatmul.mubr.f32.gmra.mxu0 %v1353
    %v1355 = vpop.f32.mrf.mxu0
    %v1356 = vadd.f32 %v1276, %v1355
    %v1357 = vpop.f32.mrf.mxu0
    %v1358 = vadd.f32 %v1278, %v1357
    %1359 = vdwg.mxu0
    %1360 = vst [vmem:[#allocation2] sm:$0x3f] %v813
    %1361 = vst [vmem:[#allocation2 + $0x8] sm:$0x3f] %v815
    %1362 = vst [vmem:[#allocation2 + $0x10] sm:$0x3f] %v1356
    %1363 = vst [vmem:[#allocation2 + $0x18] sm:$0x3f] %v1358
    // Predicated region
    $region14: #{tpu_custom_call.1} parent=1 // pred_check
      _
    $region15: #{tpu_custom_call.1} parent=1 // pred_check_branch
      %1365 = sbr.rel (0) target = $region17
    $region16: #{tpu_custom_call.1} parent=1 // pred_region
      %s1367 = ssub.s32 512, 512
      %1368 = vsyncadd [#allocation3], %s1367
      %s1370 = sshll.u32 [#allocation2], 4
      %s1371 = int_to_ptr.vmem [resolvable:$true] %s1370
      %1373 = dma.vmem_to_hbm [thread:$0]  %s1371, 512, %s3, [#allocation3]
    $region17: #{tpu_custom_call.1} parent=1 // pred_fallthru
      _
    // Predicated region
    $region18: #{tpu_custom_call.1} parent=1 // pred_check
      _
    $region19: #{tpu_custom_call.1} parent=1 // pred_check_branch
      %1375 = sbr.rel (0) target = $region21
    $region20: #{tpu_custom_call.1} parent=1 // pred_region
      %1376 = dma.done [#allocation3], 512
    $region21: #{tpu_custom_call.1} parent=1 // pred_fallthru
      _
    %1377 = vsyncpa [#allocation3], 1

</llo_original>
